<compile_context>
chip_gen: v7x
topology: tpu7x:2x2x1
jax: 0.10.0
libtpu: 0.0.40
codegen_flags: <defaults>
</compile_context>

<pallas_src>
import jax
import jax.numpy as jnp
from jax.experimental import pallas as pl
from jax.experimental.pallas import tpu as pltpu


# ============================================================================
# Fast path: H == W == 4  =>  conv2 output is 1x1; whole forward in one kernel.
# Layout: batch on the LANE axis everywhere.
# ============================================================================
def _fused_4x4_kernel(x_ref, w1_s, b1_s, w2_ref, b2_ref,
                      wl1_ref, bl1_ref, wl2_ref, bl2_ref, wl3_ref, bl3_ref,
                      o_ref):
    x = x_ref[...]                       # (4, 4, BN)  single input channel, batch on lanes
    id_ch = b1_s.shape[0]
    ho1 = wo1 = 3                        # conv1 (k=2, VALID) on 4x4
    hp = wp = 2                          # maxpool (k=2, stride 1)

    # conv1 + ReLU + maxpool, one output channel at a time; conv1 weights are
    # scalar*vector FMAs with scalars read from SMEM; bias folded into the first tap.
    rows = []                            # p_flat rows in order cin*4 + kh*2 + kw
    for c in range(id_ch):
        h1 = w1_s[c * 4 + 0] * x[0:ho1, 0:wo1, :] + b1_s[c]
        h1 = h1 + w1_s[c * 4 + 1] * x[0:ho1, 1:1 + wo1, :]
        h1 = h1 + w1_s[c * 4 + 2] * x[1:1 + ho1, 0:wo1, :]
        h1 = h1 + w1_s[c * 4 + 3] * x[1:1 + ho1, 1:1 + wo1, :]
        h1 = jnp.maximum(h1, 0.0)                                    # (3, 3, BN)
        p = jnp.maximum(
            jnp.maximum(h1[0:hp, 0:wp, :], h1[0:hp, 1:1 + wp, :]),
            jnp.maximum(h1[1:1 + hp, 0:wp, :], h1[1:1 + hp, 1:1 + wp, :]),
        )                                                            # (2, 2, BN)
        for kh in range(2):
            for kw in range(2):
                rows.append(p[kh, kw:kw + 1, :])                     # (1, BN)
    p_flat = jnp.concatenate(rows, axis=0)                           # (4*id, BN)

    # conv2 (1x1 output) + bias + ReLU as one MXU matmul, batch stays on lanes.
    f = jnp.dot(w2_ref[...], p_flat, preferred_element_type=jnp.float32) + b2_ref[...]
    f = jnp.maximum(f, 0.0)                                          # (32, BN)

    # Fused MLP head: three lane-dense MXU matmuls against resident weights.
    h = jnp.maximum(
        jnp.dot(wl1_ref[...], f, preferred_element_type=jnp.float32) + bl1_ref[...], 0.0)
    h = jnp.maximum(
        jnp.dot(wl2_ref[...], h, preferred_element_type=jnp.float32) + bl2_ref[...], 0.0)
    o_ref[...] = (
        jnp.dot(wl3_ref[...], h, preferred_element_type=jnp.float32) + bl3_ref[...])


def _forward_fused_4x4(x_nchw, params, batch_tile):
    w1, b1, w2, b2, W1, c1, W2, c2, W3, c3 = params
    N, _, H, W = x_nchw.shape
    id_ch = w1.shape[0]
    unit = W1.shape[0]
    od = W3.shape[0]

    # (N,1,4,4) -> (4,4,N): one tiny XLA transpose; batch lands on the lane axis.
    x_t = jnp.transpose(x_nchw.reshape(N, H, W), (1, 2, 0)).astype(jnp.float32)

    # Weight packing (matches the tap/channel order used when building p_flat above).
    w1_s = w1.reshape(id_ch * 4).astype(jnp.float32)          # idx = c*4 + kh*2 + kw
    b1_s = b1.astype(jnp.float32)                              # (id,)
    w2m = w2.reshape(32, id_ch * 4).astype(jnp.float32)       # col = cin*4 + kh*2 + kw
    b2c = b2.reshape(32, 1).astype(jnp.float32)
    wl1 = W1.astype(jnp.float32)
    bl1 = c1.reshape(unit, 1).astype(jnp.float32)
    wl2 = W2.astype(jnp.float32)
    bl2 = c2.reshape(unit, 1).astype(jnp.float32)
    wl3 = W3.astype(jnp.float32)
    bl3 = c3.reshape(od, 1).astype(jnp.float32)

    # Lane tile: multiple of 128 (or all of N); keep grid >= 2 when N allows so both
    # v7x TensorCores get work; cap the tile to amortize step overhead without waste.
    if N <= 128:
        bn = N
    else:
        n128 = pl.cdiv(N, 128)
        bn = 128 * min(pl.cdiv(n128, 2), max(1, batch_tile // 128))
    grid = (pl.cdiv(N, bn),)

    out_t = pl.pallas_call(
        _fused_4x4_kernel,
        out_shape=jax.ShapeDtypeStruct((od, N), jnp.float32),
        grid=grid,
        in_specs=[
            pl.BlockSpec((H, W, bn), lambda t: (0, 0, t)),
            pl.BlockSpec(memory_space=pltpu.MemorySpace.SMEM),   # conv1 weights (scalars)
            pl.BlockSpec(memory_space=pltpu.MemorySpace.SMEM),   # conv1 bias (scalars)
            pl.BlockSpec((32, 4 * id_ch), lambda t: (0, 0)),     # conv2 weight, resident
            pl.BlockSpec((32, 1), lambda t: (0, 0)),
            pl.BlockSpec((unit, 32), lambda t: (0, 0)),          # L1
            pl.BlockSpec((unit, 1), lambda t: (0, 0)),
            pl.BlockSpec((unit, unit), lambda t: (0, 0)),        # L2
            pl.BlockSpec((unit, 1), lambda t: (0, 0)),
            pl.BlockSpec((od, unit), lambda t: (0, 0)),          # L3
            pl.BlockSpec((od, 1), lambda t: (0, 0)),
        ],
        out_specs=pl.BlockSpec((od, bn), lambda t: (0, t)),
        compiler_params=pltpu.CompilerParams(dimension_semantics=("parallel",)),
    )(x_t, w1_s, b1_s, w2m, b2c, wl1, bl1, wl2, bl2, wl3, bl3)

    return out_t.T   # (N, od); kernel stores lane-dense (od, N), tiny transpose outside


# ============================================================================
# General path (spatial > 4x4): conv stage kernel + MLP kernel (as validated before,
# with bias-folded accumulator init, bigger tiles, and grid>=2 splitting).
# ============================================================================
def _conv_stage_kernel(x_ref, w1_ref, b1_ref, w2_ref, b2_ref, o_ref):
    x = x_ref[...]          # (BN, H, W, 1)
    w1 = w1_ref[...]        # (4, id)       row = kh*2+kw
    b1 = b1_ref[...]        # (1, id)
    w2 = w2_ref[...]        # (4*id, 32)    row = (kh*2+kw)*id + cin
    b2 = b2_ref[...]        # (1, 32)

    bn, h_in, w_in, _ = x.shape
    id_ch = w1.shape[1]
    ho1, wo1 = h_in - 1, w_in - 1
    hp, wp = ho1 - 1, wo1 - 1
    ho2, wo2 = hp - 1, wp - 1

    # conv1 + bias + ReLU (bias folded into the first tap, no zeros init).
    h1 = x[:, 0:ho1, 0:wo1, :] * w1[0, :] + b1
    h1 = h1 + x[:, 0:ho1, 1:1 + wo1, :] * w1[1, :]
    h1 = h1 + x[:, 1:1 + ho1, 0:wo1, :] * w1[2, :]
    h1 = h1 + x[:, 1:1 + ho1, 1:1 + wo1, :] * w1[3, :]
    h1 = jnp.maximum(h1, 0.0)

    # maxpool 2x2, stride 1.
    p = h1[:, 0:hp, 0:wp, :]
    for kh in range(2):
        for kw in range(2):
            p = jnp.maximum(p, h1[:, kh:kh + hp, kw:kw + wp, :])

    # conv2 + bias + ReLU (bias folded into the first term).
    # TODO(synk): for >1x1 outputs the im2col regroup needed for an MXU dot is not a
    # Mosaic-safe reshape, so conv2 stays as lane-broadcast FMAs on this (low-priority) path.
    acc = p[:, 0:ho2, 0:wo2, 0:1] * w2[0, :] + b2
    for kh in range(2):
        for kw in range(2):
            patch = p[:, kh:kh + ho2, kw:kw + wo2, :]
            for c in range(id_ch):
                if kh == 0 and kw == 0 and c == 0:
                    continue
                acc = acc + patch[:, :, :, c:c + 1] * w2[(kh * 2 + kw) * id_ch + c, :]
    o_ref[...] = jnp.maximum(acc, 0.0)


def _mlp_kernel(x_ref, w1_ref, b1_ref, w2_ref, b2_ref, w3_ref, b3_ref, o_ref):
    h = jnp.dot(x_ref[...], w1_ref[...], preferred_element_type=jnp.float32) + b1_ref[...]
    h = jnp.maximum(h, 0.0)
    h = jnp.dot(h, w2_ref[...], preferred_element_type=jnp.float32) + b2_ref[...]
    h = jnp.maximum(h, 0.0)
    o_ref[...] = (
        jnp.dot(h, w3_ref[...], preferred_element_type=jnp.float32) + b3_ref[...]
    )


def _forward_general(x_nchw, params, batch_tile, row_tile):
    w1, b1, w2, b2, W1, c1, W2, c2, W3, c3 = params
    N, _, H, W = x_nchw.shape
    id_ch = w1.shape[0]
    unit = W1.shape[0]
    od = W3.shape[0]
    Ho2, Wo2 = H - 3, W - 3

    # (N,1,H,W) -> (N,H,W,1): identical row-major linearization => free bitcast reshape.
    x_nhwc = x_nchw.reshape(N, H, W, 1).astype(jnp.float32)

    w1_flat = jnp.transpose(w1[:, 0], (1, 2, 0)).reshape(4, id_ch).astype(jnp.float32)
    w2_flat = jnp.transpose(w2, (2, 3, 1, 0)).reshape(4 * id_ch, 32).astype(jnp.float32)
    b1_row = b1.reshape(1, id_ch).astype(jnp.float32)
    b2_row = b2.reshape(1, 32).astype(jnp.float32)

    bn = min(batch_tile, N)
    if pl.cdiv(N, bn) < 2 and N >= 2:
        bn = pl.cdiv(N, 2)          # keep both v7x TensorCores busy
    conv_out = pl.pallas_call(
        _conv_stage_kernel,
        out_shape=jax.ShapeDtypeStruct((N, Ho2, Wo2, 32), jnp.float32),
        grid=(pl.cdiv(N, bn),),
        in_specs=[
            pl.BlockSpec((bn, H, W, 1), lambda t: (t, 0, 0, 0)),
            pl.BlockSpec((4, id_ch), lambda t: (0, 0)),
            pl.BlockSpec((1, id_ch), lambda t: (0, 0)),
            pl.BlockSpec((4 * id_ch, 32), lambda t: (0, 0)),
            pl.BlockSpec((1, 32), lambda t: (0, 0)),
        ],
        out_specs=pl.BlockSpec((bn, Ho2, Wo2, 32), lambda t: (t, 0, 0, 0)),
        compiler_params=pltpu.CompilerParams(dimension_semantics=("parallel",)),
    )(x_nhwc, w1_flat, b1_row, w2_flat, b2_row)

    # Exact PyTorch semantics: NCHW-contiguous flatten, then view(-1, 32).
    # TODO(synk): this regroup is one XLA transpose (extra HBM pass); folding it into the
    # MLP kernel needs scalar-prefetched row gathers -- low priority for this module.
    feats = jnp.transpose(conv_out, (0, 3, 1, 2)).reshape(-1, 32)
    M = feats.shape[0]

    if M > row_tile:
        tm = row_tile
    elif M >= 16:
        tm = ((pl.cdiv(M, 2) + 7) // 8) * 8   # grid of 2 (v7x), 8-aligned row tile
    else:
        tm = M
    out = pl.pallas_call(
        _mlp_kernel,
        out_shape=jax.ShapeDtypeStruct((M, od), jnp.float32),
        grid=(pl.cdiv(M, tm),),
        in_specs=[
            pl.BlockSpec((tm, 32), lambda i: (i, 0)),
            pl.BlockSpec((32, unit), lambda i: (0, 0)),
            pl.BlockSpec((1, unit), lambda i: (0, 0)),
            pl.BlockSpec((unit, unit), lambda i: (0, 0)),
            pl.BlockSpec((1, unit), lambda i: (0, 0)),
            pl.BlockSpec((unit, od), lambda i: (0, 0)),
            pl.BlockSpec((1, od), lambda i: (0, 0)),
        ],
        out_specs=pl.BlockSpec((tm, od), lambda i: (i, 0)),
        compiler_params=pltpu.CompilerParams(dimension_semantics=("parallel",)),
    )(
        feats,
        W1.T.astype(jnp.float32), c1.reshape(1, unit).astype(jnp.float32),
        W2.T.astype(jnp.float32), c2.reshape(1, unit).astype(jnp.float32),
        W3.T.astype(jnp.float32), c3.reshape(1, od).astype(jnp.float32),
    )
    return out


# ============================================================================
# Top-level forward (shape-static dispatch).
# ============================================================================
def conv_network_forward(x_nchw, params, *, batch_tile_fused=1024, batch_tile=64,
                         row_tile=2048):
    N, Cin, H, W = x_nchw.shape
    assert Cin == 1, "ConvNetwork.conv1 expects a single input channel"
    assert H >= 4 and W >= 4, "need at least 4x4 spatial input"
    if H == 4 and W == 4:
        return _forward_fused_4x4(x_nchw, params, batch_tile_fused)
    return _forward_general(x_nchw, params, batch_tile, row_tile)


# ----------------------------------------------------------------------------
# Pure-JAX reference (matches the PyTorch forward) used for validation only.
# ----------------------------------------------------------------------------
def _ref_forward(x, params):
    w1, b1, w2, b2, W1, c1, W2, c2, W3, c3 = params
    dn = ("NCHW", "OIHW", "NCHW")
    y = jax.lax.conv_general_dilated(x, w1, (1, 1), "VALID", dimension_numbers=dn)
    y = jnp.maximum(y + b1[None, :, None, None], 0.0)
    y = jax.lax.reduce_window(y, -jnp.inf, jax.lax.max, (1, 1, 2, 2), (1, 1, 1, 1), "VALID")
    y = jax.lax.conv_general_dilated(y, w2, (1, 1), "VALID", dimension_numbers=dn)
    y = jnp.maximum(y + b2[None, :, None, None], 0.0)
    y = y.reshape(-1, 32)
    y = jnp.maximum(y @ W1.T + c1, 0.0)
    y = jnp.maximum(y @ W2.T + c2, 0.0)
    return y @ W3.T + c3


if __name__ == "__main__":
    # ConvNetwork(id=4, unit=32, od=8)
    id_ch, unit, od = 4, 32, 8

    key = jax.random.PRNGKey(0)
    ks = jax.random.split(key, 13)
    params = (
        0.1 * jax.random.normal(ks[0], (id_ch, 1, 2, 2), jnp.float32),   # conv1.weight
        0.1 * jax.random.normal(ks[1], (id_ch,), jnp.float32),           # conv1.bias
        0.1 * jax.random.normal(ks[2], (32, id_ch, 2, 2), jnp.float32),  # conv2.weight
        0.1 * jax.random.normal(ks[3], (32,), jnp.float32),              # conv2.bias
        0.1 * jax.random.normal(ks[4], (unit, 32), jnp.float32),         # L1.weight
        0.1 * jax.random.normal(ks[5], (unit,), jnp.float32),            # L1.bias
        0.1 * jax.random.normal(ks[6], (unit, unit), jnp.float32),       # L2.weight
        0.1 * jax.random.normal(ks[7], (unit,), jnp.float32),            # L2.bias
        0.1 * jax.random.normal(ks[8], (od, unit), jnp.float32),         # L3.weight
        0.1 * jax.random.normal(ks[9], (od,), jnp.float32),              # L3.bias
    )

    fwd = jax.jit(conv_network_forward)

    # Case 1: 4x4 input, small batch -> fully fused single-kernel path (batch on lanes).
    x1 = jax.random.normal(ks[10], (9, 1, 4, 4), jnp.float32)
    out1 = jax.block_until_ready(fwd(x1, params))
    ref1 = _ref_forward(x1, params)
    assert out1.shape == (9, od)
    assert jnp.allclose(out1, ref1, atol=1e-4, rtol=1e-3), "mismatch vs reference (4x4 small)"

    # Case 2: 4x4 input, batch > 128 -> multi-block lane tiling + edge padding, grid >= 2.
    x2 = jax.random.normal(ks[11], (260, 1, 4, 4), jnp.float32)
    out2 = jax.block_until_ready(fwd(x2, params))
    ref2 = _ref_forward(x2, params)
    assert out2.shape == (260, od)
    assert jnp.allclose(out2, ref2, atol=1e-4, rtol=1e-3), "mismatch vs reference (4x4 big batch)"

    # Case 3: 8x8 input (conv2 output 5x5) -> general two-kernel path (NCHW view(-1,32)).
    x3 = jax.random.normal(ks[12], (2, 1, 8, 8), jnp.float32)
    out3 = jax.block_until_ready(fwd(x3, params))
    ref3 = _ref_forward(x3, params)
    assert out3.shape == (2 * 5 * 5, od)
    assert jnp.allclose(out3, ref3, atol=1e-4, rtol=1e-3), "mismatch vs reference (8x8)"

    print("KERNEL_OK")
</pallas_src>

<mosaic_0001>
module attributes {stable_mosaic.version = 11 : i64} {
  func.func @_fused_4x4_kernel(%arg0: i32, %arg1: memref<4x4x9xf32, #tpu.memory_space<vmem>>, %arg2: memref<16xf32, #tpu.memory_space<smem>>, %arg3: memref<4xf32, #tpu.memory_space<smem>>, %arg4: memref<32x16xf32, #tpu.memory_space<vmem>>, %arg5: memref<32x1xf32, #tpu.memory_space<vmem>>, %arg6: memref<32x32xf32, #tpu.memory_space<vmem>>, %arg7: memref<32x1xf32, #tpu.memory_space<vmem>>, %arg8: memref<32x32xf32, #tpu.memory_space<vmem>>, %arg9: memref<32x1xf32, #tpu.memory_space<vmem>>, %arg10: memref<8x32xf32, #tpu.memory_space<vmem>>, %arg11: memref<8x1xf32, #tpu.memory_space<vmem>>, %arg12: memref<8x9xf32, #tpu.memory_space<vmem>>) attributes {dimension_semantics = [#tpu.dimension_semantics<parallel>], iteration_bounds = array<i64: 1>, scalar_prefetch = 0 : i64, scratch_operands = 0 : i64, tpu.core_type = #tpu.core_type<tc>, window_params = [{transform_indices = @transform_0, window_bounds = array<i64: 4, 4, 9>}, {transform_indices = @transform_1, window_bounds = array<i64: 16>}, {transform_indices = @transform_2, window_bounds = array<i64: 4>}, {pipeline_mode = #tpu.pipeline_mode<synchronous>, transform_indices = @transform_3, window_bounds = array<i64: 32, 16>}, {pipeline_mode = #tpu.pipeline_mode<synchronous>, transform_indices = @transform_4, window_bounds = array<i64: 32, 1>}, {pipeline_mode = #tpu.pipeline_mode<synchronous>, transform_indices = @transform_5, window_bounds = array<i64: 32, 32>}, {pipeline_mode = #tpu.pipeline_mode<synchronous>, transform_indices = @transform_6, window_bounds = array<i64: 32, 1>}, {pipeline_mode = #tpu.pipeline_mode<synchronous>, transform_indices = @transform_7, window_bounds = array<i64: 32, 32>}, {pipeline_mode = #tpu.pipeline_mode<synchronous>, transform_indices = @transform_8, window_bounds = array<i64: 32, 1>}, {pipeline_mode = #tpu.pipeline_mode<synchronous>, transform_indices = @transform_9, window_bounds = array<i64: 8, 32>}, {pipeline_mode = #tpu.pipeline_mode<synchronous>, transform_indices = @transform_10, window_bounds = array<i64: 8, 1>}, {transform_indices = @transform_11, window_bounds = array<i64: 8, 9>}]} {
    %c0 = arith.constant 0 : index
    %c0_0 = arith.constant 0 : index
    %c0_1 = arith.constant 0 : index
    %0 = vector.load %arg1[%c0, %c0_0, %c0_1] : memref<4x4x9xf32, #tpu.memory_space<vmem>>, vector<4x4x9xf32>
    %c0_2 = arith.constant 0 : index
    %1 = memref.load %arg2[%c0_2] : memref<16xf32, #tpu.memory_space<smem>>
    %2 = vector.extract_strided_slice %0 {offsets = [0, 0, 0], sizes = [3, 3, 9], strides = [1, 1, 1]} : vector<4x4x9xf32> to vector<3x3x9xf32>
    %3 = vector.broadcast %1 : f32 to vector<3x3x9xf32>
    %4 = arith.mulf %3, %2 : vector<3x3x9xf32>
    %c0_3 = arith.constant 0 : index
    %5 = memref.load %arg3[%c0_3] : memref<4xf32, #tpu.memory_space<smem>>
    %6 = vector.broadcast %5 : f32 to vector<3x3x9xf32>
    %7 = arith.addf %4, %6 : vector<3x3x9xf32>
    %c1 = arith.constant 1 : index
    %8 = memref.load %arg2[%c1] : memref<16xf32, #tpu.memory_space<smem>>
    %9 = vector.extract_strided_slice %0 {offsets = [0, 1, 0], sizes = [3, 3, 9], strides = [1, 1, 1]} : vector<4x4x9xf32> to vector<3x3x9xf32>
    %10 = vector.broadcast %8 : f32 to vector<3x3x9xf32>
    %11 = arith.mulf %10, %9 : vector<3x3x9xf32>
    %12 = arith.addf %7, %11 : vector<3x3x9xf32>
    %c2 = arith.constant 2 : index
    %13 = memref.load %arg2[%c2] : memref<16xf32, #tpu.memory_space<smem>>
    %14 = vector.extract_strided_slice %0 {offsets = [1, 0, 0], sizes = [3, 3, 9], strides = [1, 1, 1]} : vector<4x4x9xf32> to vector<3x3x9xf32>
    %15 = vector.broadcast %13 : f32 to vector<3x3x9xf32>
    %16 = arith.mulf %15, %14 : vector<3x3x9xf32>
    %17 = arith.addf %12, %16 : vector<3x3x9xf32>
    %c3 = arith.constant 3 : index
    %18 = memref.load %arg2[%c3] : memref<16xf32, #tpu.memory_space<smem>>
    %19 = vector.extract_strided_slice %0 {offsets = [1, 1, 0], sizes = [3, 3, 9], strides = [1, 1, 1]} : vector<4x4x9xf32> to vector<3x3x9xf32>
    %20 = vector.broadcast %18 : f32 to vector<3x3x9xf32>
    %21 = arith.mulf %20, %19 : vector<3x3x9xf32>
    %22 = arith.addf %17, %21 : vector<3x3x9xf32>
    %cst = arith.constant 0.000000e+00 : f32
    %23 = vector.broadcast %cst : f32 to vector<3x3x9xf32>
    %24 = arith.maximumf %22, %23 : vector<3x3x9xf32>
    %25 = vector.extract_strided_slice %24 {offsets = [0, 0, 0], sizes = [2, 2, 9], strides = [1, 1, 1]} : vector<3x3x9xf32> to vector<2x2x9xf32>
    %26 = vector.extract_strided_slice %24 {offsets = [0, 1, 0], sizes = [2, 2, 9], strides = [1, 1, 1]} : vector<3x3x9xf32> to vector<2x2x9xf32>
    %27 = arith.maximumf %25, %26 : vector<2x2x9xf32>
    %28 = vector.extract_strided_slice %24 {offsets = [1, 0, 0], sizes = [2, 2, 9], strides = [1, 1, 1]} : vector<3x3x9xf32> to vector<2x2x9xf32>
    %29 = vector.extract_strided_slice %24 {offsets = [1, 1, 0], sizes = [2, 2, 9], strides = [1, 1, 1]} : vector<3x3x9xf32> to vector<2x2x9xf32>
    %30 = arith.maximumf %28, %29 : vector<2x2x9xf32>
    %31 = arith.maximumf %27, %30 : vector<2x2x9xf32>
    %32 = vector.extract_strided_slice %31 {offsets = [0, 0, 0], sizes = [1, 1, 9], strides = [1, 1, 1]} : vector<2x2x9xf32> to vector<1x1x9xf32>
    %33 = vector.shape_cast %32 : vector<1x1x9xf32> to vector<1x9xf32>
    %34 = vector.extract_strided_slice %31 {offsets = [0, 1, 0], sizes = [1, 1, 9], strides = [1, 1, 1]} : vector<2x2x9xf32> to vector<1x1x9xf32>
    %35 = vector.shape_cast %34 : vector<1x1x9xf32> to vector<1x9xf32>
    %36 = vector.extract_strided_slice %31 {offsets = [1, 0, 0], sizes = [1, 1, 9], strides = [1, 1, 1]} : vector<2x2x9xf32> to vector<1x1x9xf32>
    %37 = vector.shape_cast %36 : vector<1x1x9xf32> to vector<1x9xf32>
    %38 = vector.extract_strided_slice %31 {offsets = [1, 1, 0], sizes = [1, 1, 9], strides = [1, 1, 1]} : vector<2x2x9xf32> to vector<1x1x9xf32>
    %39 = vector.shape_cast %38 : vector<1x1x9xf32> to vector<1x9xf32>
    %c4 = arith.constant 4 : index
    %40 = memref.load %arg2[%c4] : memref<16xf32, #tpu.memory_space<smem>>
    %41 = vector.extract_strided_slice %0 {offsets = [0, 0, 0], sizes = [3, 3, 9], strides = [1, 1, 1]} : vector<4x4x9xf32> to vector<3x3x9xf32>
    %42 = vector.broadcast %40 : f32 to vector<3x3x9xf32>
    %43 = arith.mulf %42, %41 : vector<3x3x9xf32>
    %c1_4 = arith.constant 1 : index
    %44 = memref.load %arg3[%c1_4] : memref<4xf32, #tpu.memory_space<smem>>
    %45 = vector.broadcast %44 : f32 to vector<3x3x9xf32>
    %46 = arith.addf %43, %45 : vector<3x3x9xf32>
    %c5 = arith.constant 5 : index
    %47 = memref.load %arg2[%c5] : memref<16xf32, #tpu.memory_space<smem>>
    %48 = vector.extract_strided_slice %0 {offsets = [0, 1, 0], sizes = [3, 3, 9], strides = [1, 1, 1]} : vector<4x4x9xf32> to vector<3x3x9xf32>
    %49 = vector.broadcast %47 : f32 to vector<3x3x9xf32>
    %50 = arith.mulf %49, %48 : vector<3x3x9xf32>
    %51 = arith.addf %46, %50 : vector<3x3x9xf32>
    %c6 = arith.constant 6 : index
    %52 = memref.load %arg2[%c6] : memref<16xf32, #tpu.memory_space<smem>>
    %53 = vector.extract_strided_slice %0 {offsets = [1, 0, 0], sizes = [3, 3, 9], strides = [1, 1, 1]} : vector<4x4x9xf32> to vector<3x3x9xf32>
    %54 = vector.broadcast %52 : f32 to vector<3x3x9xf32>
    %55 = arith.mulf %54, %53 : vector<3x3x9xf32>
    %56 = arith.addf %51, %55 : vector<3x3x9xf32>
    %c7 = arith.constant 7 : index
    %57 = memref.load %arg2[%c7] : memref<16xf32, #tpu.memory_space<smem>>
    %58 = vector.extract_strided_slice %0 {offsets = [1, 1, 0], sizes = [3, 3, 9], strides = [1, 1, 1]} : vector<4x4x9xf32> to vector<3x3x9xf32>
    %59 = vector.broadcast %57 : f32 to vector<3x3x9xf32>
    %60 = arith.mulf %59, %58 : vector<3x3x9xf32>
    %61 = arith.addf %56, %60 : vector<3x3x9xf32>
    %cst_5 = arith.constant 0.000000e+00 : f32
    %62 = vector.broadcast %cst_5 : f32 to vector<3x3x9xf32>
    %63 = arith.maximumf %61, %62 : vector<3x3x9xf32>
    %64 = vector.extract_strided_slice %63 {offsets = [0, 0, 0], sizes = [2, 2, 9], strides = [1, 1, 1]} : vector<3x3x9xf32> to vector<2x2x9xf32>
    %65 = vector.extract_strided_slice %63 {offsets = [0, 1, 0], sizes = [2, 2, 9], strides = [1, 1, 1]} : vector<3x3x9xf32> to vector<2x2x9xf32>
    %66 = arith.maximumf %64, %65 : vector<2x2x9xf32>
    %67 = vector.extract_strided_slice %63 {offsets = [1, 0, 0], sizes = [2, 2, 9], strides = [1, 1, 1]} : vector<3x3x9xf32> to vector<2x2x9xf32>
    %68 = vector.extract_strided_slice %63 {offsets = [1, 1, 0], sizes = [2, 2, 9], strides = [1, 1, 1]} : vector<3x3x9xf32> to vector<2x2x9xf32>
    %69 = arith.maximumf %67, %68 : vector<2x2x9xf32>
    %70 = arith.maximumf %66, %69 : vector<2x2x9xf32>
    %71 = vector.extract_strided_slice %70 {offsets = [0, 0, 0], sizes = [1, 1, 9], strides = [1, 1, 1]} : vector<2x2x9xf32> to vector<1x1x9xf32>
    %72 = vector.shape_cast %71 : vector<1x1x9xf32> to vector<1x9xf32>
    %73 = vector.extract_strided_slice %70 {offsets = [0, 1, 0], sizes = [1, 1, 9], strides = [1, 1, 1]} : vector<2x2x9xf32> to vector<1x1x9xf32>
    %74 = vector.shape_cast %73 : vector<1x1x9xf32> to vector<1x9xf32>
    %75 = vector.extract_strided_slice %70 {offsets = [1, 0, 0], sizes = [1, 1, 9], strides = [1, 1, 1]} : vector<2x2x9xf32> to vector<1x1x9xf32>
    %76 = vector.shape_cast %75 : vector<1x1x9xf32> to vector<1x9xf32>
    %77 = vector.extract_strided_slice %70 {offsets = [1, 1, 0], sizes = [1, 1, 9], strides = [1, 1, 1]} : vector<2x2x9xf32> to vector<1x1x9xf32>
    %78 = vector.shape_cast %77 : vector<1x1x9xf32> to vector<1x9xf32>
    %c8 = arith.constant 8 : index
    %79 = memref.load %arg2[%c8] : memref<16xf32, #tpu.memory_space<smem>>
    %80 = vector.extract_strided_slice %0 {offsets = [0, 0, 0], sizes = [3, 3, 9], strides = [1, 1, 1]} : vector<4x4x9xf32> to vector<3x3x9xf32>
    %81 = vector.broadcast %79 : f32 to vector<3x3x9xf32>
    %82 = arith.mulf %81, %80 : vector<3x3x9xf32>
    %c2_6 = arith.constant 2 : index
    %83 = memref.load %arg3[%c2_6] : memref<4xf32, #tpu.memory_space<smem>>
    %84 = vector.broadcast %83 : f32 to vector<3x3x9xf32>
    %85 = arith.addf %82, %84 : vector<3x3x9xf32>
    %c9 = arith.constant 9 : index
    %86 = memref.load %arg2[%c9] : memref<16xf32, #tpu.memory_space<smem>>
    %87 = vector.extract_strided_slice %0 {offsets = [0, 1, 0], sizes = [3, 3, 9], strides = [1, 1, 1]} : vector<4x4x9xf32> to vector<3x3x9xf32>
    %88 = vector.broadcast %86 : f32 to vector<3x3x9xf32>
    %89 = arith.mulf %88, %87 : vector<3x3x9xf32>
    %90 = arith.addf %85, %89 : vector<3x3x9xf32>
    %c10 = arith.constant 10 : index
    %91 = memref.load %arg2[%c10] : memref<16xf32, #tpu.memory_space<smem>>
    %92 = vector.extract_strided_slice %0 {offsets = [1, 0, 0], sizes = [3, 3, 9], strides = [1, 1, 1]} : vector<4x4x9xf32> to vector<3x3x9xf32>
    %93 = vector.broadcast %91 : f32 to vector<3x3x9xf32>
    %94 = arith.mulf %93, %92 : vector<3x3x9xf32>
    %95 = arith.addf %90, %94 : vector<3x3x9xf32>
    %c11 = arith.constant 11 : index
    %96 = memref.load %arg2[%c11] : memref<16xf32, #tpu.memory_space<smem>>
    %97 = vector.extract_strided_slice %0 {offsets = [1, 1, 0], sizes = [3, 3, 9], strides = [1, 1, 1]} : vector<4x4x9xf32> to vector<3x3x9xf32>
    %98 = vector.broadcast %96 : f32 to vector<3x3x9xf32>
    %99 = arith.mulf %98, %97 : vector<3x3x9xf32>
    %100 = arith.addf %95, %99 : vector<3x3x9xf32>
    %cst_7 = arith.constant 0.000000e+00 : f32
    %101 = vector.broadcast %cst_7 : f32 to vector<3x3x9xf32>
    %102 = arith.maximumf %100, %101 : vector<3x3x9xf32>
    %103 = vector.extract_strided_slice %102 {offsets = [0, 0, 0], sizes = [2, 2, 9], strides = [1, 1, 1]} : vector<3x3x9xf32> to vector<2x2x9xf32>
    %104 = vector.extract_strided_slice %102 {offsets = [0, 1, 0], sizes = [2, 2, 9], strides = [1, 1, 1]} : vector<3x3x9xf32> to vector<2x2x9xf32>
    %105 = arith.maximumf %103, %104 : vector<2x2x9xf32>
    %106 = vector.extract_strided_slice %102 {offsets = [1, 0, 0], sizes = [2, 2, 9], strides = [1, 1, 1]} : vector<3x3x9xf32> to vector<2x2x9xf32>
    %107 = vector.extract_strided_slice %102 {offsets = [1, 1, 0], sizes = [2, 2, 9], strides = [1, 1, 1]} : vector<3x3x9xf32> to vector<2x2x9xf32>
    %108 = arith.maximumf %106, %107 : vector<2x2x9xf32>
    %109 = arith.maximumf %105, %108 : vector<2x2x9xf32>
    %110 = vector.extract_strided_slice %109 {offsets = [0, 0, 0], sizes = [1, 1, 9], strides = [1, 1, 1]} : vector<2x2x9xf32> to vector<1x1x9xf32>
    %111 = vector.shape_cast %110 : vector<1x1x9xf32> to vector<1x9xf32>
    %112 = vector.extract_strided_slice %109 {offsets = [0, 1, 0], sizes = [1, 1, 9], strides = [1, 1, 1]} : vector<2x2x9xf32> to vector<1x1x9xf32>
    %113 = vector.shape_cast %112 : vector<1x1x9xf32> to vector<1x9xf32>
    %114 = vector.extract_strided_slice %109 {offsets = [1, 0, 0], sizes = [1, 1, 9], strides = [1, 1, 1]} : vector<2x2x9xf32> to vector<1x1x9xf32>
    %115 = vector.shape_cast %114 : vector<1x1x9xf32> to vector<1x9xf32>
    %116 = vector.extract_strided_slice %109 {offsets = [1, 1, 0], sizes = [1, 1, 9], strides = [1, 1, 1]} : vector<2x2x9xf32> to vector<1x1x9xf32>
    %117 = vector.shape_cast %116 : vector<1x1x9xf32> to vector<1x9xf32>
    %c12 = arith.constant 12 : index
    %118 = memref.load %arg2[%c12] : memref<16xf32, #tpu.memory_space<smem>>
    %119 = vector.extract_strided_slice %0 {offsets = [0, 0, 0], sizes = [3, 3, 9], strides = [1, 1, 1]} : vector<4x4x9xf32> to vector<3x3x9xf32>
    %120 = vector.broadcast %118 : f32 to vector<3x3x9xf32>
    %121 = arith.mulf %120, %119 : vector<3x3x9xf32>
    %c3_8 = arith.constant 3 : index
    %122 = memref.load %arg3[%c3_8] : memref<4xf32, #tpu.memory_space<smem>>
    %123 = vector.broadcast %122 : f32 to vector<3x3x9xf32>
    %124 = arith.addf %121, %123 : vector<3x3x9xf32>
    %c13 = arith.constant 13 : index
    %125 = memref.load %arg2[%c13] : memref<16xf32, #tpu.memory_space<smem>>
    %126 = vector.extract_strided_slice %0 {offsets = [0, 1, 0], sizes = [3, 3, 9], strides = [1, 1, 1]} : vector<4x4x9xf32> to vector<3x3x9xf32>
    %127 = vector.broadcast %125 : f32 to vector<3x3x9xf32>
    %128 = arith.mulf %127, %126 : vector<3x3x9xf32>
    %129 = arith.addf %124, %128 : vector<3x3x9xf32>
    %c14 = arith.constant 14 : index
    %130 = memref.load %arg2[%c14] : memref<16xf32, #tpu.memory_space<smem>>
    %131 = vector.extract_strided_slice %0 {offsets = [1, 0, 0], sizes = [3, 3, 9], strides = [1, 1, 1]} : vector<4x4x9xf32> to vector<3x3x9xf32>
    %132 = vector.broadcast %130 : f32 to vector<3x3x9xf32>
    %133 = arith.mulf %132, %131 : vector<3x3x9xf32>
    %134 = arith.addf %129, %133 : vector<3x3x9xf32>
    %c15 = arith.constant 15 : index
    %135 = memref.load %arg2[%c15] : memref<16xf32, #tpu.memory_space<smem>>
    %136 = vector.extract_strided_slice %0 {offsets = [1, 1, 0], sizes = [3, 3, 9], strides = [1, 1, 1]} : vector<4x4x9xf32> to vector<3x3x9xf32>
    %137 = vector.broadcast %135 : f32 to vector<3x3x9xf32>
    %138 = arith.mulf %137, %136 : vector<3x3x9xf32>
    %139 = arith.addf %134, %138 : vector<3x3x9xf32>
    %cst_9 = arith.constant 0.000000e+00 : f32
    %140 = vector.broadcast %cst_9 : f32 to vector<3x3x9xf32>
    %141 = arith.maximumf %139, %140 : vector<3x3x9xf32>
    %142 = vector.extract_strided_slice %141 {offsets = [0, 0, 0], sizes = [2, 2, 9], strides = [1, 1, 1]} : vector<3x3x9xf32> to vector<2x2x9xf32>
    %143 = vector.extract_strided_slice %141 {offsets = [0, 1, 0], sizes = [2, 2, 9], strides = [1, 1, 1]} : vector<3x3x9xf32> to vector<2x2x9xf32>
    %144 = arith.maximumf %142, %143 : vector<2x2x9xf32>
    %145 = vector.extract_strided_slice %141 {offsets = [1, 0, 0], sizes = [2, 2, 9], strides = [1, 1, 1]} : vector<3x3x9xf32> to vector<2x2x9xf32>
    %146 = vector.extract_strided_slice %141 {offsets = [1, 1, 0], sizes = [2, 2, 9], strides = [1, 1, 1]} : vector<3x3x9xf32> to vector<2x2x9xf32>
    %147 = arith.maximumf %145, %146 : vector<2x2x9xf32>
    %148 = arith.maximumf %144, %147 : vector<2x2x9xf32>
    %149 = vector.extract_strided_slice %148 {offsets = [0, 0, 0], sizes = [1, 1, 9], strides = [1, 1, 1]} : vector<2x2x9xf32> to vector<1x1x9xf32>
    %150 = vector.shape_cast %149 : vector<1x1x9xf32> to vector<1x9xf32>
    %151 = vector.extract_strided_slice %148 {offsets = [0, 1, 0], sizes = [1, 1, 9], strides = [1, 1, 1]} : vector<2x2x9xf32> to vector<1x1x9xf32>
    %152 = vector.shape_cast %151 : vector<1x1x9xf32> to vector<1x9xf32>
    %153 = vector.extract_strided_slice %148 {offsets = [1, 0, 0], sizes = [1, 1, 9], strides = [1, 1, 1]} : vector<2x2x9xf32> to vector<1x1x9xf32>
    %154 = vector.shape_cast %153 : vector<1x1x9xf32> to vector<1x9xf32>
    %155 = vector.extract_strided_slice %148 {offsets = [1, 1, 0], sizes = [1, 1, 9], strides = [1, 1, 1]} : vector<2x2x9xf32> to vector<1x1x9xf32>
    %156 = vector.shape_cast %155 : vector<1x1x9xf32> to vector<1x9xf32>
    %157 = tpu.concatenate %33, %35, %37, %39, %72, %74, %76, %78, %111, %113, %115, %117, %150, %152, %154, %156 in 0 : vector<1x9xf32>, vector<1x9xf32>, vector<1x9xf32>, vector<1x9xf32>, vector<1x9xf32>, vector<1x9xf32>, vector<1x9xf32>, vector<1x9xf32>, vector<1x9xf32>, vector<1x9xf32>, vector<1x9xf32>, vector<1x9xf32>, vector<1x9xf32>, vector<1x9xf32>, vector<1x9xf32>, vector<1x9xf32> -> vector<16x9xf32>
    %c0_10 = arith.constant 0 : index
    %c0_11 = arith.constant 0 : index
    %158 = vector.load %arg4[%c0_10, %c0_11] : memref<32x16xf32, #tpu.memory_space<vmem>>, vector<32x16xf32>
    %cst_12 = arith.constant dense<0.000000e+00> : vector<32x9xf32>
    %159 = tpu.matmul %158, %157, %cst_12 {dimension_numbers = #tpu.dot_dimension_numbers<[1], [0], [0], [1], [0, 0, 1, 1], [], []>} : vector<32x16xf32>, vector<16x9xf32>, vector<32x9xf32> -> vector<32x9xf32>
    %c0_13 = arith.constant 0 : index
    %c0_14 = arith.constant 0 : index
    %160 = vector.load %arg5[%c0_13, %c0_14] : memref<32x1xf32, #tpu.memory_space<vmem>>, vector<32x1xf32>
    %161 = vector.broadcast %160 : vector<32x1xf32> to vector<32x9xf32>
    %162 = arith.addf %159, %161 : vector<32x9xf32>
    %cst_15 = arith.constant 0.000000e+00 : f32
    %163 = vector.broadcast %cst_15 : f32 to vector<32x9xf32>
    %164 = arith.maximumf %162, %163 : vector<32x9xf32>
    %c0_16 = arith.constant 0 : index
    %c0_17 = arith.constant 0 : index
    %165 = vector.load %arg6[%c0_16, %c0_17] : memref<32x32xf32, #tpu.memory_space<vmem>>, vector<32x32xf32>
    %cst_18 = arith.constant dense<0.000000e+00> : vector<32x9xf32>
    %166 = tpu.matmul %165, %164, %cst_18 {dimension_numbers = #tpu.dot_dimension_numbers<[1], [0], [0], [1], [0, 0, 1, 1], [], []>} : vector<32x32xf32>, vector<32x9xf32>, vector<32x9xf32> -> vector<32x9xf32>
    %c0_19 = arith.constant 0 : index
    %c0_20 = arith.constant 0 : index
    %167 = vector.load %arg7[%c0_19, %c0_20] : memref<32x1xf32, #tpu.memory_space<vmem>>, vector<32x1xf32>
    %168 = vector.broadcast %167 : vector<32x1xf32> to vector<32x9xf32>
    %169 = arith.addf %166, %168 : vector<32x9xf32>
    %cst_21 = arith.constant 0.000000e+00 : f32
    %170 = vector.broadcast %cst_21 : f32 to vector<32x9xf32>
    %171 = arith.maximumf %169, %170 : vector<32x9xf32>
    %c0_22 = arith.constant 0 : index
    %c0_23 = arith.constant 0 : index
    %172 = vector.load %arg8[%c0_22, %c0_23] : memref<32x32xf32, #tpu.memory_space<vmem>>, vector<32x32xf32>
    %cst_24 = arith.constant dense<0.000000e+00> : vector<32x9xf32>
    %173 = tpu.matmul %172, %171, %cst_24 {dimension_numbers = #tpu.dot_dimension_numbers<[1], [0], [0], [1], [0, 0, 1, 1], [], []>} : vector<32x32xf32>, vector<32x9xf32>, vector<32x9xf32> -> vector<32x9xf32>
    %c0_25 = arith.constant 0 : index
    %c0_26 = arith.constant 0 : index
    %174 = vector.load %arg9[%c0_25, %c0_26] : memref<32x1xf32, #tpu.memory_space<vmem>>, vector<32x1xf32>
    %175 = vector.broadcast %174 : vector<32x1xf32> to vector<32x9xf32>
    %176 = arith.addf %173, %175 : vector<32x9xf32>
    %cst_27 = arith.constant 0.000000e+00 : f32
    %177 = vector.broadcast %cst_27 : f32 to vector<32x9xf32>
    %178 = arith.maximumf %176, %177 : vector<32x9xf32>
    %c0_28 = arith.constant 0 : index
    %c0_29 = arith.constant 0 : index
    %179 = vector.load %arg10[%c0_28, %c0_29] : memref<8x32xf32, #tpu.memory_space<vmem>>, vector<8x32xf32>
    %cst_30 = arith.constant dense<0.000000e+00> : vector<8x9xf32>
    %180 = tpu.matmul %179, %178, %cst_30 {dimension_numbers = #tpu.dot_dimension_numbers<[1], [0], [0], [1], [0, 0, 1, 1], [], []>} : vector<8x32xf32>, vector<32x9xf32>, vector<8x9xf32> -> vector<8x9xf32>
    %c0_31 = arith.constant 0 : index
    %c0_32 = arith.constant 0 : index
    %181 = vector.load %arg11[%c0_31, %c0_32] : memref<8x1xf32, #tpu.memory_space<vmem>>, vector<8x1xf32>
    %182 = vector.broadcast %181 : vector<8x1xf32> to vector<8x9xf32>
    %183 = arith.addf %180, %182 : vector<8x9xf32>
    %c0_33 = arith.constant 0 : index
    %c0_34 = arith.constant 0 : index
    %184 = vector.load %arg12[%c0_33, %c0_34] : memref<8x9xf32, #tpu.memory_space<vmem>>, vector<8x9xf32>
    tpu.vector_store %arg12[%c0_33, %c0_34], %183 {strides = array<i32>} : memref<8x9xf32, #tpu.memory_space<vmem>>, vector<8x9xf32>,
    return
  }
  func.func @transform_0(%arg0: i32) -> (i32, i32, i32) {
    %c0_i32 = arith.constant 0 : i32
    %c0_i32_0 = arith.constant 0 : i32
    %c0_i32_1 = arith.constant 0 : i32
    return %c0_i32, %c0_i32_0, %arg0 : i32, i32, i32
  }
  func.func @transform_1(%arg0: i32) -> i32 {
    %c0_i32 = arith.constant 0 : i32
    %c0_i32_0 = arith.constant 0 : i32
    return %c0_i32 : i32
  }
  func.func @transform_2(%arg0: i32) -> i32 {
    %c0_i32 = arith.constant 0 : i32
    %c0_i32_0 = arith.constant 0 : i32
    return %c0_i32 : i32
  }
  func.func @transform_3(%arg0: i32) -> (i32, i32) {
    %c0_i32 = arith.constant 0 : i32
    %c0_i32_0 = arith.constant 0 : i32
    %c0_i32_1 = arith.constant 0 : i32
    return %c0_i32, %c0_i32_0 : i32, i32
  }
  func.func @transform_4(%arg0: i32) -> (i32, i32) {
    %c0_i32 = arith.constant 0 : i32
    %c0_i32_0 = arith.constant 0 : i32
    %c0_i32_1 = arith.constant 0 : i32
    return %c0_i32, %c0_i32_0 : i32, i32
  }
  func.func @transform_5(%arg0: i32) -> (i32, i32) {
    %c0_i32 = arith.constant 0 : i32
    %c0_i32_0 = arith.constant 0 : i32
    %c0_i32_1 = arith.constant 0 : i32
    return %c0_i32, %c0_i32_0 : i32, i32
  }
  func.func @transform_6(%arg0: i32) -> (i32, i32) {
    %c0_i32 = arith.constant 0 : i32
    %c0_i32_0 = arith.constant 0 : i32
    %c0_i32_1 = arith.constant 0 : i32
    return %c0_i32, %c0_i32_0 : i32, i32
  }
  func.func @transform_7(%arg0: i32) -> (i32, i32) {
    %c0_i32 = arith.constant 0 : i32
    %c0_i32_0 = arith.constant 0 : i32
    %c0_i32_1 = arith.constant 0 : i32
    return %c0_i32, %c0_i32_0 : i32, i32
  }
  func.func @transform_8(%arg0: i32) -> (i32, i32) {
    %c0_i32 = arith.constant 0 : i32
    %c0_i32_0 = arith.constant 0 : i32
    %c0_i32_1 = arith.constant 0 : i32
    return %c0_i32, %c0_i32_0 : i32, i32
  }
  func.func @transform_9(%arg0: i32) -> (i32, i32) {
    %c0_i32 = arith.constant 0 : i32
    %c0_i32_0 = arith.constant 0 : i32
    %c0_i32_1 = arith.constant 0 : i32
    return %c0_i32, %c0_i32_0 : i32, i32
  }
  func.func @transform_10(%arg0: i32) -> (i32, i32) {
    %c0_i32 = arith.constant 0 : i32
    %c0_i32_0 = arith.constant 0 : i32
    %c0_i32_1 = arith.constant 0 : i32
    return %c0_i32, %c0_i32_0 : i32, i32
  }
  func.func @transform_11(%arg0: i32) -> (i32, i32) {
    %c0_i32 = arith.constant 0 : i32
    %c0_i32_0 = arith.constant 0 : i32
    return %c0_i32, %arg0 : i32, i32
  }
}

</mosaic_0001>

<llo_original>
// kernel: conv_network_forward.1
$region0: #{conv_network_forward.1}
  #allocation0 [shape = 'u32[]', space=smem, size = 0x4, offset = 0x4, fixed_abs, tag = 'smem constant byte address 0x4 - core index']
  #allocation1 [shape = 'u32[144,128]{1,0:T(1,128)}', space=vmem, size = 0x12000, scoped, tag = 'internal scratch']
  %s0 = inlined_call_operand.vmem [shape: f32[4,4,9], index: 0, kind: input, shape index: {}]
  %s1 = inlined_call_operand.vmem [shape: f32[16], index: 1, kind: input, shape index: {}]
  %s2 = inlined_call_operand.vmem [shape: f32[4], index: 2, kind: input, shape index: {}]
  %s3 = inlined_call_operand.vmem [shape: f32[32,16], index: 3, kind: input, shape index: {}]
  %s4 = inlined_call_operand.vmem [shape: f32[32,1], index: 4, kind: input, shape index: {}]
  %s5 = inlined_call_operand.vmem [shape: f32[32,32], index: 5, kind: input, shape index: {}]
  %s6 = inlined_call_operand.vmem [shape: f32[32,1], index: 6, kind: input, shape index: {}]
  %s7 = inlined_call_operand.vmem [shape: f32[32,32], index: 7, kind: input, shape index: {}]
  %s8 = inlined_call_operand.vmem [shape: f32[32,1], index: 8, kind: input, shape index: {}]
  %s9 = inlined_call_operand.vmem [shape: f32[8,32], index: 9, kind: input, shape index: {}]
  %s10 = inlined_call_operand.vmem [shape: f32[8,1], index: 10, kind: input, shape index: {}]
  %s11 = inlined_call_operand.hbm [shape: f32[8,9], index: 11, kind: output, shape index: {}]
  %s12 = sld [smem:[#allocation0]]
  $region62: #{conv_network_forward.1} parent=0
    _
  %s14 = ssub.s32 1, %s12
  %s15 = scalar_select 0, %s14, %s12
  $region1: #{conv_network_forward.1} parent=0
    #allocation2 [shape = 'u8[512]{0}', space=smem, size = 0x200, scoped, tag = 'input window, operand 1, single buffered']
    #allocation3 [shape = 's32[1]{0}', space=sflag, size = 0x4, scoped, tag = 'scoped memory for conv_network_forward.1']
    #allocation4 [shape = 's32[1]{0}', space=sflag, size = 0x4, scoped, tag = 'scoped memory for conv_network_forward.1']
    #allocation5 [shape = 'u8[512]{0}', space=smem, size = 0x200, scoped, tag = 'input window, operand 2, single buffered']
    #allocation6 [shape = 's32[1]{0}', space=sflag, size = 0x4, scoped, tag = 'scoped memory for conv_network_forward.1']
    #allocation7 [shape = 'u8[4096]{0}', space=vmem, size = 0x1000, scoped, tag = 'output window, operand 0, single buffered']
    %16 = vsyncpa [#allocation4], 0
    %17 = vsyncpa [#allocation6], 0
    %18 = vsyncpa [#allocation3], 0
    // Predicated region
    $region2: #{conv_network_forward.1} parent=1 // pred_check
      _
    $region3: #{conv_network_forward.1} parent=1 // pred_check_branch
      %20 = sbr.rel (0) target = $region5
    $region4: #{conv_network_forward.1} parent=1 // pred_region
      _
    $region5: #{conv_network_forward.1} parent=1 // pred_fallthru
      _
    // Predicated region
    $region6: #{conv_network_forward.1} parent=1 // pred_check
      _
    $region7: #{conv_network_forward.1} parent=1 // pred_check_branch
      %22 = sbr.rel (0) target = $region9
    $region8: #{conv_network_forward.1} parent=1 // pred_region
      %s24 = ssub.s32 16, 16
      %25 = vsyncadd [#allocation4], %s24
      %s27 = sshll.u32 %s1, 4
      %s28 = int_to_ptr.vmem [resolvable:$true] %s27
      %30 = dma.vmem_to_smem %s28, 16, [#allocation2], [#allocation4]
    $region9: #{conv_network_forward.1} parent=1 // pred_fallthru
      _
    // Predicated region
    $region10: #{conv_network_forward.1} parent=1 // pred_check
      _
    $region11: #{conv_network_forward.1} parent=1 // pred_check_branch
      %32 = sbr.rel (0) target = $region13
    $region12: #{conv_network_forward.1} parent=1 // pred_region
      %s34 = ssub.s32 16, 16
      %35 = vsyncadd [#allocation6], %s34
      %s37 = sshll.u32 %s2, 4
      %s38 = int_to_ptr.vmem [resolvable:$true] %s37
      %40 = dma.vmem_to_smem %s38, 16, [#allocation5], [#allocation6]
    $region13: #{conv_network_forward.1} parent=1 // pred_fallthru
      _
    // Predicated region
    $region14: #{conv_network_forward.1} parent=1 // pred_check
      _
    $region15: #{conv_network_forward.1} parent=1 // pred_check_branch
      %42 = sbr.rel (0) target = $region17
    $region16: #{conv_network_forward.1} parent=1 // pred_region
      _
    $region17: #{conv_network_forward.1} parent=1 // pred_fallthru
      _
    // Predicated region
    $region18: #{conv_network_forward.1} parent=1 // pred_check
      _
    $region19: #{conv_network_forward.1} parent=1 // pred_check_branch
      %44 = sbr.rel (0) target = $region21
    $region20: #{conv_network_forward.1} parent=1 // pred_region
      _
    $region21: #{conv_network_forward.1} parent=1 // pred_fallthru
      _
    // Predicated region
    $region22: #{conv_network_forward.1} parent=1 // pred_check
      _
    $region23: #{conv_network_forward.1} parent=1 // pred_check_branch
      %46 = sbr.rel (0) target = $region25
    $region24: #{conv_network_forward.1} parent=1 // pred_region
      _
    $region25: #{conv_network_forward.1} parent=1 // pred_fallthru
      _
    // Predicated region
    $region26: #{conv_network_forward.1} parent=1 // pred_check
      _
    $region27: #{conv_network_forward.1} parent=1 // pred_check_branch
      %48 = sbr.rel (0) target = $region29
    $region28: #{conv_network_forward.1} parent=1 // pred_region
      _
    $region29: #{conv_network_forward.1} parent=1 // pred_fallthru
      _
    // Predicated region
    $region30: #{conv_network_forward.1} parent=1 // pred_check
      _
    $region31: #{conv_network_forward.1} parent=1 // pred_check_branch
      %50 = sbr.rel (0) target = $region33
    $region32: #{conv_network_forward.1} parent=1 // pred_region
      _
    $region33: #{conv_network_forward.1} parent=1 // pred_fallthru
      _
    // Predicated region
    $region34: #{conv_network_forward.1} parent=1 // pred_check
      _
    $region35: #{conv_network_forward.1} parent=1 // pred_check_branch
      %52 = sbr.rel (0) target = $region37
    $region36: #{conv_network_forward.1} parent=1 // pred_region
      _
    $region37: #{conv_network_forward.1} parent=1 // pred_fallthru
      _
    // Predicated region
    $region38: #{conv_network_forward.1} parent=1 // pred_check
      _
    $region39: #{conv_network_forward.1} parent=1 // pred_check_branch
      %54 = sbr.rel (0) target = $region41
    $region40: #{conv_network_forward.1} parent=1 // pred_region
      _
    $region41: #{conv_network_forward.1} parent=1 // pred_fallthru
      _
    // Predicated region
    $region42: #{conv_network_forward.1} parent=1 // pred_check
      _
    $region43: #{conv_network_forward.1} parent=1 // pred_check_branch
      %56 = sbr.rel (0) target = $region45
    $region44: #{conv_network_forward.1} parent=1 // pred_region
      _
    $region45: #{conv_network_forward.1} parent=1 // pred_fallthru
      _
    // Predicated region
    $region46: #{conv_network_forward.1} parent=1 // pred_check
      _
    $region47: #{conv_network_forward.1} parent=1 // pred_check_branch
      %58 = sbr.rel (0) target = $region49
    $region48: #{conv_network_forward.1} parent=1 // pred_region
      %59 = dma.done [#allocation4], 16
    $region49: #{conv_network_forward.1} parent=1 // pred_fallthru
      _
    // Predicated region
    $region50: #{conv_network_forward.1} parent=1 // pred_check
      _
    $region51: #{conv_network_forward.1} parent=1 // pred_check_branch
      %61 = sbr.rel (0) target = $region53
    $region52: #{conv_network_forward.1} parent=1 // pred_region
      %62 = dma.done [#allocation6], 16
    $region53: #{conv_network_forward.1} parent=1 // pred_fallthru
      _
    %63 = sfence
    %v64 = vld [vmem:[%s0] sm:$0xf]
    %v65 = vld [vmem:[%s0 + $0x4] sm:$0xf]
    %v66 = vld [vmem:[%s0 + $0x8] sm:$0xf]
    %v67 = vld [vmem:[%s0 + $0xc] sm:$0xf]
    %s68 = sld [smem:[#allocation2]]
    %v69 = vstv %s68
    %v70 = vmul.f32 %v69, %v64
    %v71 = vmul.f32 %v69, %v65
    %v72 = vmul.f32 %v69, %v66
    %s73 = sld [smem:[#allocation5]]
    %v74 = vstv %s73
    %v75 = vadd.f32 %v70, %v74
    %v76 = vadd.f32 %v71, %v74
    %v77 = vadd.f32 %v72, %v74
    %s78 = sld [smem:[#allocation2 + $0x1]]
    %v79 = vstv %s78
    %v80 = vmul.f32 %v79, %v64
    %v81 = vmul.f32 %v79, %v65
    %v82 = vmul.f32 %v79, %v66
    %v86 = vrot.slane %v80, 1
    %v87 = vrot.slane %v81, 1
    %v88 = vrot.slane %v82, 1
    %v92 = vadd.f32 %v75, %v86
    %v93 = vadd.f32 %v76, %v87
    %v94 = vadd.f32 %v77, %v88
    %s95 = sld [smem:[#allocation2 + $0x2]]
    %v96 = vstv %s95
    %v97 = vmul.f32 %v96, %v65
    %v98 = vmul.f32 %v96, %v66
    %v99 = vmul.f32 %v96, %v67
    %v100 = vadd.f32 %v92, %v97
    %v101 = vadd.f32 %v93, %v98
    %v102 = vadd.f32 %v94, %v99
    %s103 = sld [smem:[#allocation2 + $0x3]]
    %v104 = vstv %s103
    %v105 = vmul.f32 %v104, %v65
    %v106 = vmul.f32 %v104, %v66
    %v107 = vmul.f32 %v104, %v67
    %v111 = vrot.slane %v105, 1
    %v112 = vrot.slane %v106, 1
    %v113 = vrot.slane %v107, 1
    %v117 = vadd.f32 %v100, %v111
    %v118 = vadd.f32 %v101, %v112
    %v119 = vadd.f32 %v102, %v113
    %v120 = vmax.f32 %v117, 0.0
    %v121 = vmax.f32 %v118, 0.0
    %v122 = vmax.f32 %v119, 0.0
    %v125 = vrot.slane %v120, 1
    %v126 = vrot.slane %v121, 1
    %v129 = vmax.f32 %v120, %v125
    %v130 = vmax.f32 %v121, %v126
    %v132 = vrot.slane %v122, 1
    %v134 = vmax.f32 %v122, %v132
    %v135 = vmax.f32 %v129, %v130
    %v136 = vmax.f32 %v130, %v134
    %s137 = sld [smem:[#allocation2 + $0x4]]
    %v138 = vstv %s137
    %v139 = vmul.f32 %v138, %v64
    %v140 = vmul.f32 %v138, %v65
    %v141 = vmul.f32 %v138, %v66
    %s142 = sld [smem:[#allocation5 + $0x1]]
    %v143 = vstv %s142
    %v144 = vadd.f32 %v139, %v143
    %v145 = vadd.f32 %v140, %v143
    %v146 = vadd.f32 %v141, %v143
    %s147 = sld [smem:[#allocation2 + $0x5]]
    %v148 = vstv %s147
    %v149 = vmul.f32 %v148, %v64
    %v150 = vmul.f32 %v148, %v65
    %v151 = vmul.f32 %v148, %v66
    %v155 = vrot.slane %v149, 1
    %v156 = vrot.slane %v150, 1
    %v157 = vrot.slane %v151, 1
    %v161 = vadd.f32 %v144, %v155
    %v162 = vadd.f32 %v145, %v156
    %v163 = vadd.f32 %v146, %v157
    %s164 = sld [smem:[#allocation2 + $0x6]]
    %v165 = vstv %s164
    %v166 = vmul.f32 %v165, %v65
    %v167 = vmul.f32 %v165, %v66
    %v168 = vmul.f32 %v165, %v67
    %v169 = vadd.f32 %v161, %v166
    %v170 = vadd.f32 %v162, %v167
    %v171 = vadd.f32 %v163, %v168
    %s172 = sld [smem:[#allocation2 + $0x7]]
    %v173 = vstv %s172
    %v174 = vmul.f32 %v173, %v65
    %v175 = vmul.f32 %v173, %v66
    %v176 = vmul.f32 %v173, %v67
    %v180 = vrot.slane %v174, 1
    %v181 = vrot.slane %v175, 1
    %v182 = vrot.slane %v176, 1
    %v186 = vadd.f32 %v169, %v180
    %v187 = vadd.f32 %v170, %v181
    %v188 = vadd.f32 %v171, %v182
    %v189 = vmax.f32 %v186, 0.0
    %v190 = vmax.f32 %v187, 0.0
    %v191 = vmax.f32 %v188, 0.0
    %v194 = vrot.slane %v189, 1
    %v195 = vrot.slane %v190, 1
    %v198 = vmax.f32 %v189, %v194
    %v199 = vmax.f32 %v190, %v195
    %v201 = vrot.slane %v191, 1
    %v203 = vmax.f32 %v191, %v201
    %v204 = vmax.f32 %v198, %v199
    %v205 = vmax.f32 %v199, %v203
    %s206 = sld [smem:[#allocation2 + $0x8]]
    %v207 = vstv %s206
    %v208 = vmul.f32 %v207, %v64
    %v209 = vmul.f32 %v207, %v65
    %v210 = vmul.f32 %v207, %v66
    %s211 = sld [smem:[#allocation5 + $0x2]]
    %v212 = vstv %s211
    %v213 = vadd.f32 %v208, %v212
    %v214 = vadd.f32 %v209, %v212
    %v215 = vadd.f32 %v210, %v212
    %s216 = sld [smem:[#allocation2 + $0x9]]
    %v217 = vstv %s216
    %v218 = vmul.f32 %v217, %v64
    %v219 = vmul.f32 %v217, %v65
    %v220 = vmul.f32 %v217, %v66
    %v224 = vrot.slane %v218, 1
    %v225 = vrot.slane %v219, 1
    %v226 = vrot.slane %v220, 1
    %v230 = vadd.f32 %v213, %v224
    %v231 = vadd.f32 %v214, %v225
    %v232 = vadd.f32 %v215, %v226
    %s233 = sld [smem:[#allocation2 + $0xa]]
    %v234 = vstv %s233
    %v235 = vmul.f32 %v234, %v65
    %v236 = vmul.f32 %v234, %v66
    %v237 = vmul.f32 %v234, %v67
    %v238 = vadd.f32 %v230, %v235
    %v239 = vadd.f32 %v231, %v236
    %v240 = vadd.f32 %v232, %v237
    %s241 = sld [smem:[#allocation2 + $0xb]]
    %v242 = vstv %s241
    %v243 = vmul.f32 %v242, %v65
    %v244 = vmul.f32 %v242, %v66
    %v245 = vmul.f32 %v242, %v67
    %v249 = vrot.slane %v243, 1
    %v250 = vrot.slane %v244, 1
    %v251 = vrot.slane %v245, 1
    %v255 = vadd.f32 %v238, %v249
    %v256 = vadd.f32 %v239, %v250
    %v257 = vadd.f32 %v240, %v251
    %v258 = vmax.f32 %v255, 0.0
    %v259 = vmax.f32 %v256, 0.0
    %v260 = vmax.f32 %v257, 0.0
    %v263 = vrot.slane %v258, 1
    %v264 = vrot.slane %v259, 1
    %v267 = vmax.f32 %v258, %v263
    %v268 = vmax.f32 %v259, %v264
    %v270 = vrot.slane %v260, 1
    %v272 = vmax.f32 %v260, %v270
    %v273 = vmax.f32 %v267, %v268
    %v274 = vmax.f32 %v268, %v272
    %s275 = sld [smem:[#allocation2 + $0xc]]
    %v276 = vstv %s275
    %v277 = vmul.f32 %v276, %v64
    %v278 = vmul.f32 %v276, %v65
    %v279 = vmul.f32 %v276, %v66
    %s280 = sld [smem:[#allocation5 + $0x3]]
    %v281 = vstv %s280
    %v282 = vadd.f32 %v277, %v281
    %v283 = vadd.f32 %v278, %v281
    %v284 = vadd.f32 %v279, %v281
    %s285 = sld [smem:[#allocation2 + $0xd]]
    %v286 = vstv %s285
    %v287 = vmul.f32 %v286, %v64
    %v288 = vmul.f32 %v286, %v65
    %v289 = vmul.f32 %v286, %v66
    %v293 = vrot.slane %v287, 1
    %v294 = vrot.slane %v288, 1
    %v295 = vrot.slane %v289, 1
    %v299 = vadd.f32 %v282, %v293
    %v300 = vadd.f32 %v283, %v294
    %v301 = vadd.f32 %v284, %v295
    %s302 = sld [smem:[#allocation2 + $0xe]]
    %v303 = vstv %s302
    %v304 = vmul.f32 %v303, %v65
    %v305 = vmul.f32 %v303, %v66
    %v306 = vmul.f32 %v303, %v67
    %v307 = vadd.f32 %v299, %v304
    %v308 = vadd.f32 %v300, %v305
    %v309 = vadd.f32 %v301, %v306
    %s310 = sld [smem:[#allocation2 + $0xf]]
    %v311 = vstv %s310
    %v312 = vmul.f32 %v311, %v65
    %v313 = vmul.f32 %v311, %v66
    %v314 = vmul.f32 %v311, %v67
    %v318 = vrot.slane %v312, 1
    %v319 = vrot.slane %v313, 1
    %v320 = vrot.slane %v314, 1
    %v324 = vadd.f32 %v307, %v318
    %v325 = vadd.f32 %v308, %v319
    %v326 = vadd.f32 %v309, %v320
    %v327 = vmax.f32 %v324, 0.0
    %v328 = vmax.f32 %v325, 0.0
    %v329 = vmax.f32 %v326, 0.0
    %v332 = vrot.slane %v327, 1
    %v333 = vrot.slane %v328, 1
    %v336 = vmax.f32 %v327, %v332
    %v337 = vmax.f32 %v328, %v333
    %v339 = vrot.slane %v329, 1
    %v341 = vmax.f32 %v329, %v339
    %v342 = vmax.f32 %v336, %v337
    %v343 = vmax.f32 %v337, %v341
    %v345 = vrot.slane %v136, 6
    %v348 = vrot.slane %v204, 4
    %v351 = vrot.slane %v205, 2
    %v354 = vrot.slane %v274, 6
    %v357 = vrot.slane %v342, 4
    %v360 = vrot.slane %v343, 2
    %vm362 = vcmask 1041408
    %v363 = vsel %vm362, %v135, %v345
    %vm364 = vcmask 1042432
    %v365 = vsel %vm364, %v363, %v345
    %vm366 = vcmask 1043456
    %v367 = vsel %vm366, %v365, %v348
    %vm368 = vcmask 1044480
    %v369 = vsel %vm368, %v367, %v348
    %vm370 = vcmask 1045504
    %v371 = vsel %vm370, %v369, %v351
    %vm372 = vcmask 1046528
    %v373 = vsel %vm372, %v371, %v351
    %v374 = vsel %vm362, %v273, %v354
    %v375 = vsel %vm364, %v374, %v354
    %v376 = vsel %vm366, %v375, %v357
    %v377 = vsel %vm368, %v376, %v357
    %v378 = vsel %vm370, %v377, %v360
    %v379 = vsel %vm372, %v378, %v360
    %v380 = vld [vmem:[%s3] sm:$0xff]
    %v381 = vld [vmem:[%s3 + $0x8] sm:$0xff]
    %v382 = vld [vmem:[%s3 + $0x10] sm:$0xff]
    %v383 = vld [vmem:[%s3 + $0x18] sm:$0xff]
    %v384 = vld [vmem:[%s4] sm:$0xff]
    %v385 = vld [vmem:[%s4 + $0x8] sm:$0xff]
    %v386 = vld [vmem:[%s4 + $0x10] sm:$0xff]
    %v387 = vld [vmem:[%s4 + $0x18] sm:$0xff]
    %389 = vset.pattern.permute.xlu0 0
    %390 = vperm.xlu0 %389, %v384
    %v391 = vpop.permute.xlu0 %390
    %394 = vset.pattern.permute.xlu0 0
    %395 = vperm.xlu0 %394, %v385
    %v396 = vpop.permute.xlu0 %395
    %399 = vset.pattern.permute.xlu0 0
    %400 = vperm.xlu0 %399, %v386
    %v401 = vpop.permute.xlu0 %400
    %404 = vset.pattern.permute.xlu0 0
    %405 = vperm.xlu0 %404, %v387
    %v406 = vpop.permute.xlu0 %405
    %vm408 = vcmask 130048
    %v410 = vsel %vm408, %v380, 0
    %v413 = vsel %vm408, %v381, 0
    %v416 = vsel %vm408, %v382, 0
    %v419 = vsel %vm408, %v383, 0
    %421 = vmatprep.subr.mxu0 0.0
    %422 = vmatpush1.msra.mxu0 %v373
    %423 = vmatprep.subr.mxu0 0.0
    %424 = vmatpush1.msra.mxu0 %v379
    %425 = vmatprep.subr.mxu0 0.0
    %426 = vmatpush1.msra.mxu0 0.0
    %427 = vmatprep.subr.mxu0 0.0
    %428 = vmatpush1.msra.mxu0 0.0
    %429 = vmatprep.subr.mxu0 0.0
    %430 = vmatpush1.msra.mxu0 0.0
    %431 = vmatprep.subr.mxu0 0.0
    %432 = vmatpush1.msra.mxu0 0.0
    %433 = vmatprep.subr.mxu0 0.0
    %434 = vmatpush1.msra.mxu0 0.0
    %435 = vmatprep.subr.mxu0 0.0
    %436 = vmatpush1.msra.mxu0 0.0
    %437 = vmatprep.subr.mxu0 0.0
    %438 = vmatpush1.msra.mxu0 0.0
    %439 = vmatprep.subr.mxu0 0.0
    %440 = vmatpush1.msra.mxu0 0.0
    %441 = vmatprep.subr.mxu0 0.0
    %442 = vmatpush1.msra.mxu0 0.0
    %443 = vmatprep.subr.mxu0 0.0
    %444 = vmatpush1.msra.mxu0 0.0
    %445 = vmatprep.subr.mxu0 0.0
    %446 = vmatpush1.msra.mxu0 0.0
    %447 = vmatprep.subr.mxu0 0.0
    %448 = vmatpush1.msra.mxu0 0.0
    %449 = vmatprep.subr.mxu0 0.0
    %450 = vmatpush1.msra.mxu0 0.0
    %451 = vmatprep.subr.mxu0 0.0
    %452 = vmatpush1.msra.mxu0 0.0
    %453 = vmatprep.subr.mxu0 0.0
    %454 = vmatpush1.msra.mxu0 0.0
    %455 = vmatprep.subr.mxu0 0.0
    %456 = vmatpush1.msra.mxu0 0.0
    %457 = vmatprep.subr.mxu0 0.0
    %458 = vmatpush1.msra.mxu0 0.0
    %459 = vmatprep.subr.mxu0 0.0
    %460 = vmatpush1.msra.mxu0 0.0
    %461 = vmatprep.subr.mxu0 0.0
    %462 = vmatpush1.msra.mxu0 0.0
    %463 = vmatprep.subr.mxu0 0.0
    %464 = vmatpush1.msra.mxu0 0.0
    %465 = vmatprep.subr.mxu0 0.0
    %466 = vmatpush1.msra.mxu0 0.0
    %467 = vmatprep.subr.mxu0 0.0
    %468 = vmatpush1.msra.mxu0 0.0
    %469 = vmatprep.subr.mxu0 0.0
    %470 = vmatpush1.msra.mxu0 0.0
    %471 = vmatprep.subr.mxu0 0.0
    %472 = vmatpush1.msra.mxu0 0.0
    %473 = vmatprep.subr.mxu0 0.0
    %474 = vmatpush1.msra.mxu0 0.0
    %475 = vmatprep.subr.mxu0 0.0
    %476 = vmatpush1.msra.mxu0 0.0
    %477 = vmatprep.subr.mxu0 0.0
    %478 = vmatpush1.msra.mxu0 0.0
    %479 = vmatprep.subr.mxu0 0.0
    %480 = vmatpush1.msra.mxu0 0.0
    %481 = vmatprep.subr.mxu0 0.0
    %482 = vmatpush1.msra.mxu0 0.0
    %483 = vmatprep.subr.mxu0 0.0
    %484 = vmatpush1.msra.mxu0 0.0
    %485 = vmatprep.mubr.f32.mxu0 0.0
    %486 = vmatmul.mubr.f32.gmra.mrb[0].mxu0 %v410
    %v487 = vpop.f32.mrb[0].mxu0
    %v488 = vadd.f32 %v391, %v487
    %v489 = vpop.f32.mrb[0].mxu0
    %490 = vmatprep.mubr.f32.mxu0 0.0
    %491 = vmatmul.mubr.f32.gmra.mrb[0].mxu0 %v413
    %v492 = vpop.f32.mrb[0].mxu0
    %v493 = vadd.f32 %v396, %v492
    %v494 = vpop.f32.mrb[0].mxu0
    %495 = vmatprep.mubr.f32.mxu0 0.0
    %496 = vmatmul.mubr.f32.gmra.mrb[0].mxu0 %v416
    %v497 = vpop.f32.mrb[0].mxu0
    %v498 = vadd.f32 %v401, %v497
    %v499 = vpop.f32.mrb[0].mxu0
    %500 = vmatprep.mubr.f32.mxu0 0.0
    %501 = vmatmul.mubr.f32.gmra.mrb[0].mxu0 %v419
    %v502 = vpop.f32.mrb[0].mxu0
    %v503 = vadd.f32 %v406, %v502
    %v504 = vpop.f32.mrb[0].mxu0
    %505 = vdwg.mxu0
    %v506 = vmax.f32 %v488, 0.0
    %v507 = vmax.f32 %v493, 0.0
    %v508 = vmax.f32 %v498, 0.0
    %v509 = vmax.f32 %v503, 0.0
    %v510 = vld [vmem:[%s5] sm:$0xff]
    %v511 = vld [vmem:[%s5 + $0x8] sm:$0xff]
    %v512 = vld [vmem:[%s5 + $0x10] sm:$0xff]
    %v513 = vld [vmem:[%s5 + $0x18] sm:$0xff]
    %v514 = vld [vmem:[%s6] sm:$0xff]
    %v515 = vld [vmem:[%s6 + $0x8] sm:$0xff]
    %v516 = vld [vmem:[%s6 + $0x10] sm:$0xff]
    %v517 = vld [vmem:[%s6 + $0x18] sm:$0xff]
    %519 = vset.pattern.permute.xlu0 0
    %520 = vperm.xlu0 %519, %v514
    %v521 = vpop.permute.xlu0 %520
    %524 = vset.pattern.permute.xlu0 0
    %525 = vperm.xlu0 %524, %v515
    %v526 = vpop.permute.xlu0 %525
    %529 = vset.pattern.permute.xlu0 0
    %530 = vperm.xlu0 %529, %v516
    %v531 = vpop.permute.xlu0 %530
    %534 = vset.pattern.permute.xlu0 0
    %535 = vperm.xlu0 %534, %v517
    %v536 = vpop.permute.xlu0 %535
    %vm538 = vcmask 261120
    %v540 = vsel %vm538, %v510, 0
    %v543 = vsel %vm538, %v511, 0
    %v546 = vsel %vm538, %v512, 0
    %v549 = vsel %vm538, %v513, 0
    %551 = vmatprep.subr.mxu0 0.0
    %552 = vmatpush1.msra.mxu0 %v506
    %553 = vmatprep.subr.mxu0 0.0
    %554 = vmatpush1.msra.mxu0 %v507
    %555 = vmatprep.subr.mxu0 0.0
    %556 = vmatpush1.msra.mxu0 %v508
    %557 = vmatprep.subr.mxu0 0.0
    %558 = vmatpush1.msra.mxu0 %v509
    %559 = vmatprep.subr.mxu0 0.0
    %560 = vmatpush1.msra.mxu0 0.0
    %561 = vmatprep.subr.mxu0 0.0
    %562 = vmatpush1.msra.mxu0 0.0
    %563 = vmatprep.subr.mxu0 0.0
    %564 = vmatpush1.msra.mxu0 0.0
    %565 = vmatprep.subr.mxu0 0.0
    %566 = vmatpush1.msra.mxu0 0.0
    %567 = vmatprep.subr.mxu0 0.0
    %568 = vmatpush1.msra.mxu0 0.0
    %569 = vmatprep.subr.mxu0 0.0
    %570 = vmatpush1.msra.mxu0 0.0
    %571 = vmatprep.subr.mxu0 0.0
    %572 = vmatpush1.msra.mxu0 0.0
    %573 = vmatprep.subr.mxu0 0.0
    %574 = vmatpush1.msra.mxu0 0.0
    %575 = vmatprep.subr.mxu0 0.0
    %576 = vmatpush1.msra.mxu0 0.0
    %577 = vmatprep.subr.mxu0 0.0
    %578 = vmatpush1.msra.mxu0 0.0
    %579 = vmatprep.subr.mxu0 0.0
    %580 = vmatpush1.msra.mxu0 0.0
    %581 = vmatprep.subr.mxu0 0.0
    %582 = vmatpush1.msra.mxu0 0.0
    %583 = vmatprep.subr.mxu0 0.0
    %584 = vmatpush1.msra.mxu0 0.0
    %585 = vmatprep.subr.mxu0 0.0
    %586 = vmatpush1.msra.mxu0 0.0
    %587 = vmatprep.subr.mxu0 0.0
    %588 = vmatpush1.msra.mxu0 0.0
    %589 = vmatprep.subr.mxu0 0.0
    %590 = vmatpush1.msra.mxu0 0.0
    %591 = vmatprep.subr.mxu0 0.0
    %592 = vmatpush1.msra.mxu0 0.0
    %593 = vmatprep.subr.mxu0 0.0
    %594 = vmatpush1.msra.mxu0 0.0
    %595 = vmatprep.subr.mxu0 0.0
    %596 = vmatpush1.msra.mxu0 0.0
    %597 = vmatprep.subr.mxu0 0.0
    %598 = vmatpush1.msra.mxu0 0.0
    %599 = vmatprep.subr.mxu0 0.0
    %600 = vmatpush1.msra.mxu0 0.0
    %601 = vmatprep.subr.mxu0 0.0
    %602 = vmatpush1.msra.mxu0 0.0
    %603 = vmatprep.subr.mxu0 0.0
    %604 = vmatpush1.msra.mxu0 0.0
    %605 = vmatprep.subr.mxu0 0.0
    %606 = vmatpush1.msra.mxu0 0.0
    %607 = vmatprep.subr.mxu0 0.0
    %608 = vmatpush1.msra.mxu0 0.0
    %609 = vmatprep.subr.mxu0 0.0
    %610 = vmatpush1.msra.mxu0 0.0
    %611 = vmatprep.subr.mxu0 0.0
    %612 = vmatpush1.msra.mxu0 0.0
    %613 = vmatprep.subr.mxu0 0.0
    %614 = vmatpush1.msra.mxu0 0.0
    %615 = vmatprep.mubr.f32.mxu0 0.0
    %616 = vmatmul.mubr.f32.gmra.mrb[0].mxu0 %v540
    %v617 = vpop.f32.mrb[0].mxu0
    %v618 = vadd.f32 %v521, %v617
    %v619 = vpop.f32.mrb[0].mxu0
    %620 = vmatprep.mubr.f32.mxu0 0.0
    %621 = vmatmul.mubr.f32.gmra.mrb[0].mxu0 %v543
    %v622 = vpop.f32.mrb[0].mxu0
    %v623 = vadd.f32 %v526, %v622
    %v624 = vpop.f32.mrb[0].mxu0
    %625 = vmatprep.mubr.f32.mxu0 0.0
    %626 = vmatmul.mubr.f32.gmra.mrb[0].mxu0 %v546
    %v627 = vpop.f32.mrb[0].mxu0
    %v628 = vadd.f32 %v531, %v627
    %v629 = vpop.f32.mrb[0].mxu0
    %630 = vmatprep.mubr.f32.mxu0 0.0
    %631 = vmatmul.mubr.f32.gmra.mrb[0].mxu0 %v549
    %v632 = vpop.f32.mrb[0].mxu0
    %v633 = vadd.f32 %v536, %v632
    %v634 = vpop.f32.mrb[0].mxu0
    %635 = vdwg.mxu0
    %v636 = vmax.f32 %v618, 0.0
    %v637 = vmax.f32 %v623, 0.0
    %v638 = vmax.f32 %v628, 0.0
    %v639 = vmax.f32 %v633, 0.0
    %v640 = vld [vmem:[%s7] sm:$0xff]
    %v641 = vld [vmem:[%s7 + $0x8] sm:$0xff]
    %v642 = vld [vmem:[%s7 + $0x10] sm:$0xff]
    %v643 = vld [vmem:[%s7 + $0x18] sm:$0xff]
    %v644 = vld [vmem:[%s8] sm:$0xff]
    %v645 = vld [vmem:[%s8 + $0x8] sm:$0xff]
    %v646 = vld [vmem:[%s8 + $0x10] sm:$0xff]
    %v647 = vld [vmem:[%s8 + $0x18] sm:$0xff]
    %649 = vset.pattern.permute.xlu0 0
    %650 = vperm.xlu0 %649, %v644
    %v651 = vpop.permute.xlu0 %650
    %654 = vset.pattern.permute.xlu0 0
    %655 = vperm.xlu0 %654, %v645
    %v656 = vpop.permute.xlu0 %655
    %659 = vset.pattern.permute.xlu0 0
    %660 = vperm.xlu0 %659, %v646
    %v661 = vpop.permute.xlu0 %660
    %664 = vset.pattern.permute.xlu0 0
    %665 = vperm.xlu0 %664, %v647
    %v666 = vpop.permute.xlu0 %665
    %v669 = vsel %vm538, %v640, 0
    %v672 = vsel %vm538, %v641, 0
    %v675 = vsel %vm538, %v642, 0
    %v678 = vsel %vm538, %v643, 0
    %680 = vmatprep.subr.mxu0 0.0
    %681 = vmatpush1.msra.mxu0 %v636
    %682 = vmatprep.subr.mxu0 0.0
    %683 = vmatpush1.msra.mxu0 %v637
    %684 = vmatprep.subr.mxu0 0.0
    %685 = vmatpush1.msra.mxu0 %v638
    %686 = vmatprep.subr.mxu0 0.0
    %687 = vmatpush1.msra.mxu0 %v639
    %688 = vmatprep.subr.mxu0 0.0
    %689 = vmatpush1.msra.mxu0 0.0
    %690 = vmatprep.subr.mxu0 0.0
    %691 = vmatpush1.msra.mxu0 0.0
    %692 = vmatprep.subr.mxu0 0.0
    %693 = vmatpush1.msra.mxu0 0.0
    %694 = vmatprep.subr.mxu0 0.0
    %695 = vmatpush1.msra.mxu0 0.0
    %696 = vmatprep.subr.mxu0 0.0
    %697 = vmatpush1.msra.mxu0 0.0
    %698 = vmatprep.subr.mxu0 0.0
    %699 = vmatpush1.msra.mxu0 0.0
    %700 = vmatprep.subr.mxu0 0.0
    %701 = vmatpush1.msra.mxu0 0.0
    %702 = vmatprep.subr.mxu0 0.0
    %703 = vmatpush1.msra.mxu0 0.0
    %704 = vmatprep.subr.mxu0 0.0
    %705 = vmatpush1.msra.mxu0 0.0
    %706 = vmatprep.subr.mxu0 0.0
    %707 = vmatpush1.msra.mxu0 0.0
    %708 = vmatprep.subr.mxu0 0.0
    %709 = vmatpush1.msra.mxu0 0.0
    %710 = vmatprep.subr.mxu0 0.0
    %711 = vmatpush1.msra.mxu0 0.0
    %712 = vmatprep.subr.mxu0 0.0
    %713 = vmatpush1.msra.mxu0 0.0
    %714 = vmatprep.subr.mxu0 0.0
    %715 = vmatpush1.msra.mxu0 0.0
    %716 = vmatprep.subr.mxu0 0.0
    %717 = vmatpush1.msra.mxu0 0.0
    %718 = vmatprep.subr.mxu0 0.0
    %719 = vmatpush1.msra.mxu0 0.0
    %720 = vmatprep.subr.mxu0 0.0
    %721 = vmatpush1.msra.mxu0 0.0
    %722 = vmatprep.subr.mxu0 0.0
    %723 = vmatpush1.msra.mxu0 0.0
    %724 = vmatprep.subr.mxu0 0.0
    %725 = vmatpush1.msra.mxu0 0.0
    %726 = vmatprep.subr.mxu0 0.0
    %727 = vmatpush1.msra.mxu0 0.0
    %728 = vmatprep.subr.mxu0 0.0
    %729 = vmatpush1.msra.mxu0 0.0
    %730 = vmatprep.subr.mxu0 0.0
    %731 = vmatpush1.msra.mxu0 0.0
    %732 = vmatprep.subr.mxu0 0.0
    %733 = vmatpush1.msra.mxu0 0.0
    %734 = vmatprep.subr.mxu0 0.0
    %735 = vmatpush1.msra.mxu0 0.0
    %736 = vmatprep.subr.mxu0 0.0
    %737 = vmatpush1.msra.mxu0 0.0
    %738 = vmatprep.subr.mxu0 0.0
    %739 = vmatpush1.msra.mxu0 0.0
    %740 = vmatprep.subr.mxu0 0.0
    %741 = vmatpush1.msra.mxu0 0.0
    %742 = vmatprep.subr.mxu0 0.0
    %743 = vmatpush1.msra.mxu0 0.0
    %744 = vmatprep.mubr.f32.mxu0 0.0
    %745 = vmatmul.mubr.f32.gmra.mrb[0].mxu0 %v669
    %v746 = vpop.f32.mrb[0].mxu0
    %v747 = vadd.f32 %v651, %v746
    %v748 = vpop.f32.mrb[0].mxu0
    %749 = vmatprep.mubr.f32.mxu0 0.0
    %750 = vmatmul.mubr.f32.gmra.mrb[0].mxu0 %v672
    %v751 = vpop.f32.mrb[0].mxu0
    %v752 = vadd.f32 %v656, %v751
    %v753 = vpop.f32.mrb[0].mxu0
    %754 = vmatprep.mubr.f32.mxu0 0.0
    %755 = vmatmul.mubr.f32.gmra.mrb[0].mxu0 %v675
    %v756 = vpop.f32.mrb[0].mxu0
    %v757 = vadd.f32 %v661, %v756
    %v758 = vpop.f32.mrb[0].mxu0
    %759 = vmatprep.mubr.f32.mxu0 0.0
    %760 = vmatmul.mubr.f32.gmra.mrb[0].mxu0 %v678
    %v761 = vpop.f32.mrb[0].mxu0
    %v762 = vadd.f32 %v666, %v761
    %v763 = vpop.f32.mrb[0].mxu0
    %764 = vdwg.mxu0
    %v765 = vmax.f32 %v747, 0.0
    %v766 = vmax.f32 %v752, 0.0
    %v767 = vmax.f32 %v757, 0.0
    %v768 = vmax.f32 %v762, 0.0
    %v769 = vld [vmem:[%s9] sm:$0xff]
    %v770 = vld [vmem:[%s10] sm:$0xff]
    %772 = vset.pattern.permute.xlu0 0
    %773 = vperm.xlu0 %772, %v770
    %v774 = vpop.permute.xlu0 %773
    %v777 = vsel %vm538, %v769, 0
    %779 = vmatprep.subr.mxu0 0.0
    %780 = vmatpush1.msra.mxu0 %v765
    %781 = vmatprep.subr.mxu0 0.0
    %782 = vmatpush1.msra.mxu0 %v766
    %783 = vmatprep.subr.mxu0 0.0
    %784 = vmatpush1.msra.mxu0 %v767
    %785 = vmatprep.subr.mxu0 0.0
    %786 = vmatpush1.msra.mxu0 %v768
    %787 = vmatprep.subr.mxu0 0.0
    %788 = vmatpush1.msra.mxu0 0.0
    %789 = vmatprep.subr.mxu0 0.0
    %790 = vmatpush1.msra.mxu0 0.0
    %791 = vmatprep.subr.mxu0 0.0
    %792 = vmatpush1.msra.mxu0 0.0
    %793 = vmatprep.subr.mxu0 0.0
    %794 = vmatpush1.msra.mxu0 0.0
    %795 = vmatprep.subr.mxu0 0.0
    %796 = vmatpush1.msra.mxu0 0.0
    %797 = vmatprep.subr.mxu0 0.0
    %798 = vmatpush1.msra.mxu0 0.0
    %799 = vmatprep.subr.mxu0 0.0
    %800 = vmatpush1.msra.mxu0 0.0
    %801 = vmatprep.subr.mxu0 0.0
    %802 = vmatpush1.msra.mxu0 0.0
    %803 = vmatprep.subr.mxu0 0.0
    %804 = vmatpush1.msra.mxu0 0.0
    %805 = vmatprep.subr.mxu0 0.0
    %806 = vmatpush1.msra.mxu0 0.0
    %807 = vmatprep.subr.mxu0 0.0
    %808 = vmatpush1.msra.mxu0 0.0
    %809 = vmatprep.subr.mxu0 0.0
    %810 = vmatpush1.msra.mxu0 0.0
    %811 = vmatprep.subr.mxu0 0.0
    %812 = vmatpush1.msra.mxu0 0.0
    %813 = vmatprep.subr.mxu0 0.0
    %814 = vmatpush1.msra.mxu0 0.0
    %815 = vmatprep.subr.mxu0 0.0
    %816 = vmatpush1.msra.mxu0 0.0
    %817 = vmatprep.subr.mxu0 0.0
    %818 = vmatpush1.msra.mxu0 0.0
    %819 = vmatprep.subr.mxu0 0.0
    %820 = vmatpush1.msra.mxu0 0.0
    %821 = vmatprep.subr.mxu0 0.0
    %822 = vmatpush1.msra.mxu0 0.0
    %823 = vmatprep.subr.mxu0 0.0
    %824 = vmatpush1.msra.mxu0 0.0
    %825 = vmatprep.subr.mxu0 0.0
    %826 = vmatpush1.msra.mxu0 0.0
    %827 = vmatprep.subr.mxu0 0.0
    %828 = vmatpush1.msra.mxu0 0.0
    %829 = vmatprep.subr.mxu0 0.0
    %830 = vmatpush1.msra.mxu0 0.0
    %831 = vmatprep.subr.mxu0 0.0
    %832 = vmatpush1.msra.mxu0 0.0
    %833 = vmatprep.subr.mxu0 0.0
    %834 = vmatpush1.msra.mxu0 0.0
    %835 = vmatprep.subr.mxu0 0.0
    %836 = vmatpush1.msra.mxu0 0.0
    %837 = vmatprep.subr.mxu0 0.0
    %838 = vmatpush1.msra.mxu0 0.0
    %839 = vmatprep.subr.mxu0 0.0
    %840 = vmatpush1.msra.mxu0 0.0
    %841 = vmatprep.subr.mxu0 0.0
    %842 = vmatpush1.msra.mxu0 0.0
    %843 = vmatprep.mubr.f32.mxu0 0.0
    %844 = vmatmul.mubr.f32.gmra.mrb[0].mxu0 %v777
    %v845 = vpop.f32.mrb[0].mxu0
    %v846 = vadd.f32 %v774, %v845
    %v847 = vpop.f32.mrb[0].mxu0
    %848 = vdwg.mxu0
    %vm849 = vcmask 72704
    %850 = vst.msk [vmem:[#allocation7] sm:$0xff] %vm849, %v846
    // Predicated region
    $region54: #{conv_network_forward.1} parent=1 // pred_check
      _
    $region55: #{conv_network_forward.1} parent=1 // pred_check_branch
      %852 = sbr.rel (0) target = $region57
    $region56: #{conv_network_forward.1} parent=1 // pred_region
      %s854 = ssub.s32 128, 128
      %855 = vsyncadd [#allocation3], %s854
      %s857 = sshll.u32 [#allocation7], 4
      %s858 = int_to_ptr.vmem [resolvable:$true] %s857
      %860 = dma.vmem_to_hbm [thread:$0]  %s858, 128, %s11, [#allocation3]
    $region57: #{conv_network_forward.1} parent=1 // pred_fallthru
      _
    // Predicated region
    $region58: #{conv_network_forward.1} parent=1 // pred_check
      _
    $region59: #{conv_network_forward.1} parent=1 // pred_check_branch
      %862 = sbr.rel (0) target = $region61
    $region60: #{conv_network_forward.1} parent=1 // pred_region
      %863 = dma.done [#allocation3], 128
    $region61: #{conv_network_forward.1} parent=1 // pred_fallthru
      _
    %864 = vsyncpa [#allocation3], 1
    %865 = vsyncpa [#allocation4], 1
    %866 = vsyncpa [#allocation6], 1

</llo_original>
